<compile_context>
chip_gen: v7x
topology: tpu7x:2x2x1
jax: 0.10.0
libtpu: 0.0.40
codegen_flags: <defaults>
</compile_context>

<pallas_src>
import jax
import jax.numpy as jnp
from jax.experimental import pallas as pl
from jax.experimental.pallas import tpu as pltpu

# Logical (PyTorch) dims
D_IN, D_H1, D_H2, D_OUT = 55, 300, 100, 1
BN_EPS = 1e-5


def _pad_to(n, m):
    return ((n + m - 1) // m) * m


# Lane-padded hidden dims (multiples of 128 on the lane axis).
P_H1 = _pad_to(D_H1, 128)   # 384
P_H2 = _pad_to(D_H2, 128)   # 128

MAX_TB = 1024        # rows per grid step; large tiles amortize per-step overhead
TARGET_STEPS = 4     # >=2 grid steps so both v7x TensorCores get work


def _choose_tb(batch):
    """Batch-tile rows: multiple of 8 (f32 sublanes), aims for ~TARGET_STEPS
    grid steps, capped at MAX_TB. Tiny batches use one full-extent block."""
    if batch < 16:
        return batch
    tb = _pad_to(pl.cdiv(batch, TARGET_STEPS), 8)
    return max(8, min(MAX_TB, tb))


def mlp_kernel(x_ref, w1_ref, b1_ref, w2_ref, b2_ref, w3_ref, b3_ref, o_ref):
    # Layer 1: Linear(55, 300) + ReLU.  bf16 MXU operands, f32 accumulation.
    # TODO(synk): nn.Dropout(p=0.4) is training-only (RNG mask); eval forward
    # is identity, so it is intentionally omitted here.
    x_bf = x_ref[...].astype(jnp.bfloat16)
    h1 = jnp.dot(x_bf, w1_ref[...], preferred_element_type=jnp.float32)
    h1 = jnp.maximum(h1 + b1_ref[...], 0.0)

    # Layer 2: Linear(300, 100) with BatchNorm1d(300) pre-folded into W2/b2, + ReLU.
    h2 = jnp.dot(h1.astype(jnp.bfloat16), w2_ref[...],
                 preferred_element_type=jnp.float32)
    h2 = jnp.maximum(h2 + b2_ref[...], 0.0)

    # Layer 3: Linear(100, 1) with BatchNorm1d(100) pre-folded into W3/b3, + Sigmoid.
    # Single real output column -> VPU multiply + lane reduction (no N=1 MXU
    # matmul); bias-add and tanh run only on the width-1 column, all in f32.
    h3 = jnp.sum(h2 * w3_ref[...], axis=-1, keepdims=True) + b3_ref[...]
    # sigmoid(z) == 0.5*tanh(0.5*z) + 0.5  (single EUP transcendental)
    o_ref[...] = 0.5 * jnp.tanh(0.5 * h3) + 0.5


def _pad2(a, rows, cols):
    return jnp.zeros((rows, cols), jnp.float32).at[:a.shape[0], :a.shape[1]].set(a)


def prepare_params(params):
    """One-time preprocessing (off the serving path): fold eval-mode BatchNorm
    into the following Linear layer, zero-pad hidden dims to lane multiples,
    and cast MXU weight operands to bf16."""
    (w1, b1, g1, be1, rm1, rv1,
     w2, b2, g2, be2, rm2, rv2,
     w3, b3) = params

    # BN(eval) -> per-feature scale/shift.
    s1 = g1 / jnp.sqrt(rv1 + BN_EPS)
    t1 = be1 - rm1 * s1
    s2 = g2 / jnp.sqrt(rv2 + BN_EPS)
    t2 = be2 - rm2 * s2

    # (relu(h)*s + t) @ W + b == relu(h) @ (s[:,None]*W) + (t @ W + b)
    w2f = s1[:, None] * w2
    b2f = b2 + t1 @ w2
    w3f = s2[:, None] * w3                      # (100, 1)
    b3f = b3 + t2 @ w3                          # (1,)

    w1p = _pad2(w1, D_IN, P_H1).astype(jnp.bfloat16)    # (55, 384)  bf16
    b1p = _pad2(b1[None, :], 1, P_H1)                   # (1, 384)   f32
    w2p = _pad2(w2f, P_H1, P_H2).astype(jnp.bfloat16)   # (384, 128) bf16
    b2p = _pad2(b2f[None, :], 1, P_H2)                  # (1, 128)   f32
    w3p = _pad2(w3f.T, 1, P_H2)                         # (1, 128)   f32 row
    b3p = b3f.reshape(1, 1).astype(jnp.float32)         # (1, 1)     f32
    return (w1p, b1p, w2p, b2p, w3p, b3p)


@jax.jit
def mlp_forward(x, prepared):
    """x: (B, 55) float32 -> (B, 1) float32, using pre-folded/padded params."""
    w1p, b1p, w2p, b2p, w3p, b3p = prepared
    B = x.shape[0]
    TB = _choose_tb(B)
    const = lambda i: (0, 0)   # weights/biases stay VMEM-resident across the grid

    return pl.pallas_call(
        mlp_kernel,
        out_shape=jax.ShapeDtypeStruct((B, D_OUT), jnp.float32),
        grid=(pl.cdiv(B, TB),),
        in_specs=[
            pl.BlockSpec((TB, D_IN), lambda i: (i, 0)),   # x streamed (raw width 55)
            pl.BlockSpec((D_IN, P_H1), const),            # w1 (bf16)
            pl.BlockSpec((1, P_H1), const),               # b1
            pl.BlockSpec((P_H1, P_H2), const),            # w2 (bf16, BN1 folded)
            pl.BlockSpec((1, P_H2), const),               # b2
            pl.BlockSpec((1, P_H2), const),               # w3 row (BN2 folded)
            pl.BlockSpec((1, D_OUT), const),              # b3
        ],
        out_specs=pl.BlockSpec((TB, D_OUT), lambda i: (i, 0)),   # (B, 1) direct
        compiler_params=pltpu.CompilerParams(
            dimension_semantics=("parallel",),   # 2-TC sharding on v7x; no-op v5e/v6e
            vmem_limit_bytes=32 * 1024 * 1024,
        ),
    )(x, w1p, b1p, w2p, b2p, w3p, b3p)


def init_params(key):
    ks = jax.random.split(key, 10)

    def lin(kw, kb, fan_in, fan_out):
        bound = 1.0 / jnp.sqrt(fan_in)
        w = jax.random.uniform(kw, (fan_in, fan_out), jnp.float32, -bound, bound)
        b = jax.random.uniform(kb, (fan_out,), jnp.float32, -bound, bound)
        return w, b

    w1, b1 = lin(ks[0], ks[1], D_IN, D_H1)
    w2, b2 = lin(ks[2], ks[3], D_H1, D_H2)
    w3, b3 = lin(ks[4], ks[5], D_H2, D_OUT)

    # BatchNorm params / running stats (deterministic, non-trivial).
    g1 = 1.0 + 0.1 * jax.random.normal(ks[6], (D_H1,), jnp.float32)
    be1 = 0.1 * jax.random.normal(ks[7], (D_H1,), jnp.float32)
    rm1 = 0.05 * jax.random.normal(ks[8], (D_H1,), jnp.float32)
    rv1 = jnp.abs(1.0 + 0.1 * jax.random.normal(ks[9], (D_H1,), jnp.float32))

    kg2, kb2, km2, kv2 = jax.random.split(ks[6], 4)
    g2 = 1.0 + 0.1 * jax.random.normal(kg2, (D_H2,), jnp.float32)
    be2 = 0.1 * jax.random.normal(kb2, (D_H2,), jnp.float32)
    rm2 = 0.05 * jax.random.normal(km2, (D_H2,), jnp.float32)
    rv2 = jnp.abs(1.0 + 0.1 * jax.random.normal(kv2, (D_H2,), jnp.float32))

    return (w1, b1, g1, be1, rm1, rv1,
            w2, b2, g2, be2, rm2, rv2,
            w3, b3)


def reference_forward(x, params):
    (w1, b1, g1, be1, rm1, rv1,
     w2, b2, g2, be2, rm2, rv2,
     w3, b3) = params
    h = jnp.maximum(x @ w1 + b1, 0.0)
    h = (h - rm1) / jnp.sqrt(rv1 + BN_EPS) * g1 + be1
    h = jnp.maximum(h @ w2 + b2, 0.0)
    h = (h - rm2) / jnp.sqrt(rv2 + BN_EPS) * g2 + be2
    return jax.nn.sigmoid(h @ w3 + b3)


if __name__ == "__main__":
    key = jax.random.PRNGKey(0)
    kx, kp = jax.random.split(key)
    params = init_params(kp)

    prepared = prepare_params(params)         # one-time fold + pad + bf16 cast
    prepared = jax.tree_util.tree_map(jax.block_until_ready, prepared)

    # Small batch: single full-extent block, one grid step.
    B = 8
    x = jax.random.normal(kx, (B, D_IN), jnp.float32)
    y = mlp_forward(x, prepared)
    jax.block_until_ready(y)
    y_ref = reference_forward(x, params)
    assert y.shape == (B, D_OUT)
    assert jnp.allclose(y, y_ref, atol=2e-2, rtol=2e-2), (
        f"max abs err {jnp.max(jnp.abs(y - y_ref))}")

    # Larger batch: multi-step grid (4 steps, ragged last block), same params.
    B2 = 200
    x2 = jax.random.normal(jax.random.PRNGKey(1), (B2, D_IN), jnp.float32)
    y2 = mlp_forward(x2, prepared)
    jax.block_until_ready(y2)
    y2_ref = reference_forward(x2, params)
    assert y2.shape == (B2, D_OUT)
    assert jnp.allclose(y2, y2_ref, atol=2e-2, rtol=2e-2), (
        f"max abs err {jnp.max(jnp.abs(y2 - y2_ref))}")

    print("KERNEL_OK")
</pallas_src>

<mosaic_0001>
module attributes {stable_mosaic.version = 11 : i64} {
  func.func @mlp_kernel(%arg0: i32, %arg1: memref<8x55xf32, #tpu.memory_space<vmem>>, %arg2: memref<55x384xbf16, #tpu.memory_space<vmem>>, %arg3: memref<1x384xf32, #tpu.memory_space<vmem>>, %arg4: memref<384x128xbf16, #tpu.memory_space<vmem>>, %arg5: memref<1x128xf32, #tpu.memory_space<vmem>>, %arg6: memref<1x128xf32, #tpu.memory_space<vmem>>, %arg7: memref<1x1xf32, #tpu.memory_space<vmem>>, %arg8: memref<8x1xf32, #tpu.memory_space<vmem>>) attributes {dimension_semantics = [#tpu.dimension_semantics<parallel>], iteration_bounds = array<i64: 1>, scalar_prefetch = 0 : i64, scratch_operands = 0 : i64, tpu.core_type = #tpu.core_type<tc>, window_params = [{transform_indices = @transform_0, window_bounds = array<i64: 8, 55>}, {pipeline_mode = #tpu.pipeline_mode<synchronous>, transform_indices = @transform_1, window_bounds = array<i64: 55, 384>}, {pipeline_mode = #tpu.pipeline_mode<synchronous>, transform_indices = @transform_2, window_bounds = array<i64: 1, 384>}, {pipeline_mode = #tpu.pipeline_mode<synchronous>, transform_indices = @transform_3, window_bounds = array<i64: 384, 128>}, {pipeline_mode = #tpu.pipeline_mode<synchronous>, transform_indices = @transform_4, window_bounds = array<i64: 1, 128>}, {pipeline_mode = #tpu.pipeline_mode<synchronous>, transform_indices = @transform_5, window_bounds = array<i64: 1, 128>}, {pipeline_mode = #tpu.pipeline_mode<synchronous>, transform_indices = @transform_6, window_bounds = array<i64: 1, 1>}, {transform_indices = @transform_7, window_bounds = array<i64: 8, 1>}]} {
    %c0 = arith.constant 0 : index
    %c0_0 = arith.constant 0 : index
    %0 = vector.load %arg1[%c0, %c0_0] : memref<8x55xf32, #tpu.memory_space<vmem>>, vector<8x55xf32>
    %1 = arith.truncf %0 : vector<8x55xf32> to vector<8x55xbf16>
    %c0_1 = arith.constant 0 : index
    %c0_2 = arith.constant 0 : index
    %2 = vector.load %arg2[%c0_1, %c0_2] : memref<55x384xbf16, #tpu.memory_space<vmem>>, vector<55x384xbf16>
    %cst = arith.constant dense<0.000000e+00> : vector<8x384xf32>
    %3 = tpu.matmul %1, %2, %cst {dimension_numbers = #tpu.dot_dimension_numbers<[1], [0], [0], [1], [0, 0, 1, 1], [], []>} : vector<8x55xbf16>, vector<55x384xbf16>, vector<8x384xf32> -> vector<8x384xf32>
    %c0_3 = arith.constant 0 : index
    %c0_4 = arith.constant 0 : index
    %4 = vector.load %arg3[%c0_3, %c0_4] : memref<1x384xf32, #tpu.memory_space<vmem>>, vector<1x384xf32>
    %5 = vector.broadcast %4 : vector<1x384xf32> to vector<8x384xf32>
    %6 = arith.addf %3, %5 : vector<8x384xf32>
    %cst_5 = arith.constant 0.000000e+00 : f32
    %7 = vector.broadcast %cst_5 : f32 to vector<8x384xf32>
    %8 = arith.maximumf %6, %7 : vector<8x384xf32>
    %9 = arith.truncf %8 : vector<8x384xf32> to vector<8x384xbf16>
    %c0_6 = arith.constant 0 : index
    %c0_7 = arith.constant 0 : index
    %10 = vector.load %arg4[%c0_6, %c0_7] : memref<384x128xbf16, #tpu.memory_space<vmem>>, vector<384x128xbf16>
    %cst_8 = arith.constant dense<0.000000e+00> : vector<8x128xf32>
    %11 = tpu.matmul %9, %10, %cst_8 {dimension_numbers = #tpu.dot_dimension_numbers<[1], [0], [0], [1], [0, 0, 1, 1], [], []>} : vector<8x384xbf16>, vector<384x128xbf16>, vector<8x128xf32> -> vector<8x128xf32>
    %c0_9 = arith.constant 0 : index
    %c0_10 = arith.constant 0 : index
    %12 = vector.load %arg5[%c0_9, %c0_10] : memref<1x128xf32, #tpu.memory_space<vmem>>, vector<1x128xf32>
    %13 = vector.broadcast %12 : vector<1x128xf32> to vector<8x128xf32>
    %14 = arith.addf %11, %13 : vector<8x128xf32>
    %cst_11 = arith.constant 0.000000e+00 : f32
    %15 = vector.broadcast %cst_11 : f32 to vector<8x128xf32>
    %16 = arith.maximumf %14, %15 : vector<8x128xf32>
    %c0_12 = arith.constant 0 : index
    %c0_13 = arith.constant 0 : index
    %17 = vector.load %arg6[%c0_12, %c0_13] : memref<1x128xf32, #tpu.memory_space<vmem>>, vector<1x128xf32>
    %18 = vector.broadcast %17 : vector<1x128xf32> to vector<8x128xf32>
    %19 = arith.mulf %16, %18 : vector<8x128xf32>
    %cst_14 = arith.constant dense<0.000000e+00> : vector<8xf32>
    %20 = vector.multi_reduction <add>, %19, %cst_14 [1] : vector<8x128xf32> to vector<8xf32>
    %21 = vector.shape_cast %20 : vector<8xf32> to vector<8x1xf32>
    %c0_15 = arith.constant 0 : index
    %c0_16 = arith.constant 0 : index
    %22 = vector.load %arg7[%c0_15, %c0_16] : memref<1x1xf32, #tpu.memory_space<vmem>>, vector<1x1xf32>
    %23 = vector.broadcast %22 : vector<1x1xf32> to vector<8x1xf32>
    %24 = arith.addf %21, %23 : vector<8x1xf32>
    %cst_17 = arith.constant 5.000000e-01 : f32
    %25 = vector.broadcast %cst_17 : f32 to vector<8x1xf32>
    %26 = arith.mulf %25, %24 : vector<8x1xf32>
    %27 = math.tanh %26 : vector<8x1xf32>
    %cst_18 = arith.constant 5.000000e-01 : f32
    %28 = vector.broadcast %cst_18 : f32 to vector<8x1xf32>
    %29 = arith.mulf %28, %27 : vector<8x1xf32>
    %cst_19 = arith.constant 5.000000e-01 : f32
    %30 = vector.broadcast %cst_19 : f32 to vector<8x1xf32>
    %31 = arith.addf %29, %30 : vector<8x1xf32>
    %c0_20 = arith.constant 0 : index
    %c0_21 = arith.constant 0 : index
    %32 = vector.load %arg8[%c0_20, %c0_21] : memref<8x1xf32, #tpu.memory_space<vmem>>, vector<8x1xf32>
    tpu.vector_store %arg8[%c0_20, %c0_21], %31 {strides = array<i32>} : memref<8x1xf32, #tpu.memory_space<vmem>>, vector<8x1xf32>,
    return
  }
  func.func @transform_0(%arg0: i32) -> (i32, i32) {
    %c0_i32 = arith.constant 0 : i32
    %c0_i32_0 = arith.constant 0 : i32
    return %arg0, %c0_i32 : i32, i32
  }
  func.func @transform_1(%arg0: i32) -> (i32, i32) {
    %c0_i32 = arith.constant 0 : i32
    %c0_i32_0 = arith.constant 0 : i32
    %c0_i32_1 = arith.constant 0 : i32
    return %c0_i32, %c0_i32_0 : i32, i32
  }
  func.func @transform_2(%arg0: i32) -> (i32, i32) {
    %c0_i32 = arith.constant 0 : i32
    %c0_i32_0 = arith.constant 0 : i32
    %c0_i32_1 = arith.constant 0 : i32
    return %c0_i32, %c0_i32_0 : i32, i32
  }
  func.func @transform_3(%arg0: i32) -> (i32, i32) {
    %c0_i32 = arith.constant 0 : i32
    %c0_i32_0 = arith.constant 0 : i32
    %c0_i32_1 = arith.constant 0 : i32
    return %c0_i32, %c0_i32_0 : i32, i32
  }
  func.func @transform_4(%arg0: i32) -> (i32, i32) {
    %c0_i32 = arith.constant 0 : i32
    %c0_i32_0 = arith.constant 0 : i32
    %c0_i32_1 = arith.constant 0 : i32
    return %c0_i32, %c0_i32_0 : i32, i32
  }
  func.func @transform_5(%arg0: i32) -> (i32, i32) {
    %c0_i32 = arith.constant 0 : i32
    %c0_i32_0 = arith.constant 0 : i32
    %c0_i32_1 = arith.constant 0 : i32
    return %c0_i32, %c0_i32_0 : i32, i32
  }
  func.func @transform_6(%arg0: i32) -> (i32, i32) {
    %c0_i32 = arith.constant 0 : i32
    %c0_i32_0 = arith.constant 0 : i32
    %c0_i32_1 = arith.constant 0 : i32
    return %c0_i32, %c0_i32_0 : i32, i32
  }
  func.func @transform_7(%arg0: i32) -> (i32, i32) {
    %c0_i32 = arith.constant 0 : i32
    %c0_i32_0 = arith.constant 0 : i32
    return %arg0, %c0_i32 : i32, i32
  }
}

</mosaic_0001>

<llo_original>
// kernel: mlp_forward.1
$region0: #{mlp_forward.1}
  #allocation0 [shape = 'u32[]', space=smem, size = 0x4, offset = 0x4, fixed_abs, tag = 'smem constant byte address 0x4 - core index']
  #allocation1 [shape = 'u32[144,128]{1,0:T(1,128)}', space=vmem, size = 0x12000, scoped, tag = 'internal scratch']
  #allocation2 [shape = 'f32[1,1]{1,0:T(1,128)S(1)}', space=vmem, size = 0x200, scoped, tag = 'scoped memory for mlp_forward.1']
  %s0 = inlined_call_operand.hbm [shape: f32[8,55], index: 0, kind: input, shape index: {}]
  %s1 = inlined_call_operand.hbm [shape: bf16[55,384], index: 1, kind: input, shape index: {}]
  %s2 = inlined_call_operand.vmem [shape: f32[1,384], index: 2, kind: input, shape index: {}]
  %s3 = inlined_call_operand.hbm [shape: bf16[384,128], index: 3, kind: input, shape index: {}]
  %s4 = inlined_call_operand.vmem [shape: f32[1,128], index: 4, kind: input, shape index: {}]
  %s5 = inlined_call_operand.vmem [shape: f32[1,128], index: 5, kind: input, shape index: {}]
  %s6 = inlined_call_operand.<no memory space> [shape: f32[1,1], index: 6, kind: input, shape index: {}]
  %s7 = inlined_call_operand.vmem [shape: f32[8,1], index: 7, kind: output, shape index: {}]
  %s8 = sld [smem:[#allocation0]]
  $region50: #{mlp_forward.1} parent=0
    _
  %s10 = ssub.s32 1, %s8
  %s11 = scalar_select 0, %s10, %s8
  %v12 = vstv %s6
  %13 = vst [vmem:[#allocation2] sm:$0x1] %v12
  $region1: #{mlp_forward.1} parent=0
    #allocation3 [shape = 'u8[4096]{0}', space=vmem, size = 0x1000, scoped, tag = 'input window, operand 0, single buffered']
    #allocation4 [shape = 's32[1]{0}', space=sflag, size = 0x4, scoped, tag = 'scoped memory for mlp_forward.1']
    #allocation5 [shape = 'u8[43008]{0}', space=vmem, size = 0xa800, scoped, tag = 'input window, operand 1, single buffered']
    #allocation6 [shape = 's32[1]{0}', space=sflag, size = 0x4, scoped, tag = 'scoped memory for mlp_forward.1']
    #allocation7 [shape = 'u8[98304]{0}', space=vmem, size = 0x18000, scoped, tag = 'input window, operand 3, single buffered']
    %14 = vsyncpa [#allocation4], 0
    %15 = vsyncpa [#allocation6], 0
    // Predicated region
    $region2: #{mlp_forward.1} parent=1 // pred_check
      _
    $region3: #{mlp_forward.1} parent=1 // pred_check_branch
      %17 = sbr.rel (0) target = $region5
    $region4: #{mlp_forward.1} parent=1 // pred_region
      %s19 = ssub.s32 128, 128
      %20 = vsyncadd [#allocation4], %s19
      %s22 = sshll.u32 [#allocation3], 4
      %s23 = int_to_ptr.vmem [resolvable:$true] %s22
      %25 = dma.hbm_to_vmem [thread:$0]  %s0, 128, %s23, [#allocation4]
    $region5: #{mlp_forward.1} parent=1 // pred_fallthru
      _
    // Predicated region
    $region6: #{mlp_forward.1} parent=1 // pred_check
      _
    $region7: #{mlp_forward.1} parent=1 // pred_check_branch
      %27 = sbr.rel (0) target = $region9
    $region8: #{mlp_forward.1} parent=1 // pred_region
      %s29 = ssub.s32 1344, 1344
      %30 = vsyncadd [#allocation6], %s29
      %s31 = sshll.u32 [#allocation5], 4
      %s32 = int_to_ptr.vmem [resolvable:$true] %s31
      %37 = dma.hbm_to_vmem [thread:$0]  %s1, 1344, %s32, [#allocation6], 192, 192, 12
    $region9: #{mlp_forward.1} parent=1 // pred_fallthru
      _
    // Predicated region
    $region10: #{mlp_forward.1} parent=1 // pred_check
      _
    $region11: #{mlp_forward.1} parent=1 // pred_check_branch
      %39 = sbr.rel (0) target = $region13
    $region12: #{mlp_forward.1} parent=1 // pred_region
      _
    $region13: #{mlp_forward.1} parent=1 // pred_fallthru
      _
    // Predicated region
    $region14: #{mlp_forward.1} parent=1 // pred_check
      _
    $region15: #{mlp_forward.1} parent=1 // pred_check_branch
      %41 = sbr.rel (0) target = $region17
    $region16: #{mlp_forward.1} parent=1 // pred_region
      %s43 = ssub.s32 3072, 3072
      %44 = vsyncadd [#allocation6], %s43
      %s45 = sshll.u32 [#allocation7], 4
      %s46 = int_to_ptr.vmem [resolvable:$true] %s45
      %51 = dma.hbm_to_vmem [thread:$0]  %s3, 3072, %s46, [#allocation6], 64, 64, 4
    $region17: #{mlp_forward.1} parent=1 // pred_fallthru
      _
    // Predicated region
    $region18: #{mlp_forward.1} parent=1 // pred_check
      _
    $region19: #{mlp_forward.1} parent=1 // pred_check_branch
      %53 = sbr.rel (0) target = $region21
    $region20: #{mlp_forward.1} parent=1 // pred_region
      _
    $region21: #{mlp_forward.1} parent=1 // pred_fallthru
      _
    // Predicated region
    $region22: #{mlp_forward.1} parent=1 // pred_check
      _
    $region23: #{mlp_forward.1} parent=1 // pred_check_branch
      %55 = sbr.rel (0) target = $region25
    $region24: #{mlp_forward.1} parent=1 // pred_region
      _
    $region25: #{mlp_forward.1} parent=1 // pred_fallthru
      _
    // Predicated region
    $region26: #{mlp_forward.1} parent=1 // pred_check
      _
    $region27: #{mlp_forward.1} parent=1 // pred_check_branch
      %57 = sbr.rel (0) target = $region29
    $region28: #{mlp_forward.1} parent=1 // pred_region
      _
    $region29: #{mlp_forward.1} parent=1 // pred_fallthru
      _
    // Predicated region
    $region30: #{mlp_forward.1} parent=1 // pred_check
      _
    $region31: #{mlp_forward.1} parent=1 // pred_check_branch
      %59 = sbr.rel (0) target = $region33
    $region32: #{mlp_forward.1} parent=1 // pred_region
      %60 = dma.done [#allocation4], 128
    $region33: #{mlp_forward.1} parent=1 // pred_fallthru
      _
    // Predicated region
    $region34: #{mlp_forward.1} parent=1 // pred_check
      _
    $region35: #{mlp_forward.1} parent=1 // pred_check_branch
      %62 = sbr.rel (0) target = $region37
    $region36: #{mlp_forward.1} parent=1 // pred_region
      %63 = dma.done [#allocation6], 1344
    $region37: #{mlp_forward.1} parent=1 // pred_fallthru
      _
    // Predicated region
    $region38: #{mlp_forward.1} parent=1 // pred_check
      _
    $region39: #{mlp_forward.1} parent=1 // pred_check_branch
      %65 = sbr.rel (0) target = $region41
    $region40: #{mlp_forward.1} parent=1 // pred_region
      %66 = dma.done [#allocation6], 3072
    $region41: #{mlp_forward.1} parent=1 // pred_fallthru
      _
    %v68 = vld [vmem:[#allocation3] sm:$0xff]
    %v69 = vpack.c.bf16 %v68, %v68
    %v70 = vld [vmem:[#allocation5] sm:$0xff]
    %v71 = vld [vmem:[#allocation5 + $0x8] sm:$0xf]
    %v72 = vld [vmem:[#allocation5 + $0xc] sm:$0xff]
    %v73 = vld [vmem:[#allocation5 + $0x14] sm:$0xf]
    %v74 = vld [vmem:[#allocation5 + $0x18] sm:$0xff]
    %v75 = vld [vmem:[#allocation5 + $0x20] sm:$0xf]
    %v76 = vld [vmem:[#allocation5 + $0x24] sm:$0xff]
    %v77 = vld [vmem:[#allocation5 + $0x2c] sm:$0xf]
    %v78 = vld [vmem:[#allocation5 + $0x30] sm:$0xff]
    %v79 = vld [vmem:[#allocation5 + $0x38] sm:$0xf]
    %v80 = vld [vmem:[#allocation5 + $0x3c] sm:$0xff]
    %v81 = vld [vmem:[#allocation5 + $0x44] sm:$0xf]
    %v82 = vld [vmem:[#allocation5 + $0x48] sm:$0xff]
    %v83 = vld [vmem:[#allocation5 + $0x50] sm:$0xf]
    %v84 = vld [vmem:[%s2] sm:$0x7]
    %v86 = vlaneseq
    %v87 = vshrl.u32 %v86, 7
    %v88 = vsub.s32 0, %v87
    %v89 = vrot.slane %v84, %v88
    %v90 = vlaneseq
    %v91 = vshrl.u32 %v90, 7
    %v92 = vsub.s32 1, %v91
    %v93 = vrot.slane %v84, %v92
    %v94 = vlaneseq
    %v95 = vshrl.u32 %v94, 7
    %v96 = vsub.s32 2, %v95
    %v97 = vrot.slane %v84, %v96
    %v115 = vunpack.c.l.b16 %v70
    %v116 = vunpack.c.h.b16 %v70
    %v117 = vunpack.c.l.b16 %v71
    %v118 = vunpack.c.l.b16 %v72
    %v119 = vunpack.c.h.b16 %v72
    %v120 = vunpack.c.l.b16 %v73
    %v121 = vunpack.c.l.b16 %v74
    %v122 = vunpack.c.h.b16 %v74
    %v123 = vunpack.c.l.b16 %v75
    %v124 = vunpack.c.l.b16 %v76
    %v125 = vunpack.c.h.b16 %v76
    %v126 = vunpack.c.l.b16 %v77
    %v127 = vunpack.c.l.b16 %v78
    %v128 = vunpack.c.h.b16 %v78
    %v129 = vunpack.c.l.b16 %v79
    %v130 = vunpack.c.l.b16 %v80
    %v131 = vunpack.c.h.b16 %v80
    %v132 = vunpack.c.l.b16 %v81
    %v133 = vunpack.c.l.b16 %v82
    %v134 = vunpack.c.h.b16 %v82
    %v135 = vunpack.c.l.b16 %v83
    %v136 = vpack.c.b16 %v118, %v115
    %v137 = vpack.c.b16 %v119, %v116
    %v138 = vpack.c.b16 %v120, %v117
    %v139 = vpack.c.b16 %v124, %v121
    %v140 = vpack.c.b16 %v125, %v122
    %v141 = vpack.c.b16 %v126, %v123
    %v142 = vpack.c.b16 %v130, %v127
    %v143 = vpack.c.b16 %v131, %v128
    %v144 = vpack.c.b16 %v132, %v129
    %v145 = vpack.c.b16 %v133, %v133
    %v146 = vpack.c.b16 %v134, %v134
    %v147 = vpack.c.b16 %v135, %v135
    %vm157 = vcmask 449536
    %v159 = vsel %vm157, %v69, 0
    %vm161 = vcmask 1042432
    %vm162 = vcmask 1043456
    %v163 = vsel %vm161, 4294967295, 65535
    %v164 = vsel %vm162, %v163, 0
    %v166 = vand.u32 %v145, %v164
    %v169 = vand.u32 %v146, %v164
    %v172 = vand.u32 %v147, %v164
    %174 = vmatprep.subr.bf16.mxu0 %v137
    %175 = vmatpush1.bf16.msra.mxu0 %v136
    %176 = vmatprep.subr.bf16.mxu0 %v140
    %177 = vmatpush1.bf16.msra.mxu0 %v139
    %178 = vmatprep.subr.bf16.mxu0 %v143
    %179 = vmatpush1.bf16.msra.mxu0 %v142
    %180 = vmatprep.subr.bf16.mxu0 %v169
    %181 = vmatpush1.bf16.msra.mxu0 %v166
    %182 = vmatprep.subr.bf16.mxu0 0
    %183 = vmatpush1.bf16.msra.mxu0 0
    %184 = vmatprep.subr.bf16.mxu0 0
    %185 = vmatpush1.bf16.msra.mxu0 0
    %186 = vmatprep.subr.bf16.mxu0 0
    %187 = vmatpush1.bf16.msra.mxu0 0
    %188 = vmatprep.subr.bf16.mxu0 0
    %189 = vmatpush1.bf16.msra.mxu0 0
    %190 = vmatprep.subr.bf16.mxu0 0
    %191 = vmatpush1.bf16.msra.mxu0 0
    %192 = vmatprep.subr.bf16.mxu0 0
    %193 = vmatpush1.bf16.msra.mxu0 0
    %194 = vmatprep.subr.bf16.mxu0 0
    %195 = vmatpush1.bf16.msra.mxu0 0
    %196 = vmatprep.subr.bf16.mxu0 0
    %197 = vmatpush1.bf16.msra.mxu0 0
    %198 = vmatprep.subr.bf16.mxu0 0
    %199 = vmatpush1.bf16.msra.mxu0 0
    %200 = vmatprep.subr.bf16.mxu0 0
    %201 = vmatpush1.bf16.msra.mxu0 0
    %202 = vmatprep.subr.bf16.mxu0 0
    %203 = vmatpush1.bf16.msra.mxu0 0
    %204 = vmatprep.subr.bf16.mxu0 0
    %205 = vmatpush1.bf16.msra.mxu0 0
    %206 = vmatprep.mubr.bf16.mxu0 0
    %207 = vmatmul.mubr.bf16.gmra.mrb[0].mxu0 %v159
    %v208 = vpop.f32.mrb[0].mxu0
    %v209 = vadd.f32 %v89, %v208
    %v210 = vpop.f32.mrb[0].mxu0
    %v211 = vadd.f32 %v93, %v210
    %v212 = vpop.f32.mrb[0].mxu0
    %v213 = vpop.f32.mrb[0].mxu0
    %214 = vdwg.mxu0
    %215 = vmatprep.subr.bf16.mxu0 0
    %216 = vmatpush1.bf16.msra.mxu0 %v138
    %217 = vmatprep.subr.bf16.mxu0 0
    %218 = vmatpush1.bf16.msra.mxu0 %v141
    %219 = vmatprep.subr.bf16.mxu0 0
    %220 = vmatpush1.bf16.msra.mxu0 %v144
    %221 = vmatprep.subr.bf16.mxu0 0
    %222 = vmatpush1.bf16.msra.mxu0 %v172
    %223 = vmatprep.subr.bf16.mxu0 0
    %224 = vmatpush1.bf16.msra.mxu0 0
    %225 = vmatprep.subr.bf16.mxu0 0
    %226 = vmatpush1.bf16.msra.mxu0 0
    %227 = vmatprep.subr.bf16.mxu0 0
    %228 = vmatpush1.bf16.msra.mxu0 0
    %229 = vmatprep.subr.bf16.mxu0 0
    %230 = vmatpush1.bf16.msra.mxu0 0
    %231 = vmatprep.subr.bf16.mxu0 0
    %232 = vmatpush1.bf16.msra.mxu0 0
    %233 = vmatprep.subr.bf16.mxu0 0
    %234 = vmatpush1.bf16.msra.mxu0 0
    %235 = vmatprep.subr.bf16.mxu0 0
    %236 = vmatpush1.bf16.msra.mxu0 0
    %237 = vmatprep.subr.bf16.mxu0 0
    %238 = vmatpush1.bf16.msra.mxu0 0
    %239 = vmatprep.subr.bf16.mxu0 0
    %240 = vmatpush1.bf16.msra.mxu0 0
    %241 = vmatprep.subr.bf16.mxu0 0
    %242 = vmatpush1.bf16.msra.mxu0 0
    %243 = vmatprep.subr.bf16.mxu0 0
    %244 = vmatpush1.bf16.msra.mxu0 0
    %245 = vmatprep.subr.bf16.mxu0 0
    %246 = vmatpush1.bf16.msra.mxu0 0
    %247 = vmatprep.mubr.bf16.mxu0 0
    %248 = vmatmul.mubr.bf16.gmra.mrb[0].mxu0 %v159
    %v249 = vpop.f32.mrb[0].mxu0
    %v250 = vadd.f32 %v97, %v249
    %v251 = vpop.f32.mrb[0].mxu0
    %v252 = vpop.f32.mrb[0].mxu0
    %v253 = vpop.f32.mrb[0].mxu0
    %254 = vdwg.mxu0
    %v255 = vmax.f32 %v209, 0.0
    %v256 = vmax.f32 %v211, 0.0
    %v257 = vmax.f32 %v250, 0.0
    %v258 = vpack.c.bf16 %v255, %v255
    %v259 = vpack.c.bf16 %v256, %v256
    %v260 = vpack.c.bf16 %v257, %v257
    %v261 = vld [vmem:[#allocation7] sm:$0xf]
    %v262 = vld [vmem:[#allocation7 + $0x4] sm:$0xf]
    %v263 = vld [vmem:[#allocation7 + $0x8] sm:$0xf]
    %v264 = vld [vmem:[#allocation7 + $0xc] sm:$0xf]
    %v265 = vld [vmem:[#allocation7 + $0x10] sm:$0xf]
    %v266 = vld [vmem:[#allocation7 + $0x14] sm:$0xf]
    %v267 = vld [vmem:[#allocation7 + $0x18] sm:$0xf]
    %v268 = vld [vmem:[#allocation7 + $0x1c] sm:$0xf]
    %v269 = vld [vmem:[#allocation7 + $0x20] sm:$0xf]
    %v270 = vld [vmem:[#allocation7 + $0x24] sm:$0xf]
    %v271 = vld [vmem:[#allocation7 + $0x28] sm:$0xf]
    %v272 = vld [vmem:[#allocation7 + $0x2c] sm:$0xf]
    %v273 = vld [vmem:[#allocation7 + $0x30] sm:$0xf]
    %v274 = vld [vmem:[#allocation7 + $0x34] sm:$0xf]
    %v275 = vld [vmem:[#allocation7 + $0x38] sm:$0xf]
    %v276 = vld [vmem:[#allocation7 + $0x3c] sm:$0xf]
    %v277 = vld [vmem:[#allocation7 + $0x40] sm:$0xf]
    %v278 = vld [vmem:[#allocation7 + $0x44] sm:$0xf]
    %v279 = vld [vmem:[#allocation7 + $0x48] sm:$0xf]
    %v280 = vld [vmem:[#allocation7 + $0x4c] sm:$0xf]
    %v281 = vld [vmem:[#allocation7 + $0x50] sm:$0xf]
    %v282 = vld [vmem:[#allocation7 + $0x54] sm:$0xf]
    %v283 = vld [vmem:[#allocation7 + $0x58] sm:$0xf]
    %v284 = vld [vmem:[#allocation7 + $0x5c] sm:$0xf]
    %v285 = vld [vmem:[#allocation7 + $0x60] sm:$0xf]
    %v286 = vld [vmem:[#allocation7 + $0x64] sm:$0xf]
    %v287 = vld [vmem:[#allocation7 + $0x68] sm:$0xf]
    %v288 = vld [vmem:[#allocation7 + $0x6c] sm:$0xf]
    %v289 = vld [vmem:[#allocation7 + $0x70] sm:$0xf]
    %v290 = vld [vmem:[#allocation7 + $0x74] sm:$0xf]
    %v291 = vld [vmem:[#allocation7 + $0x78] sm:$0xf]
    %v292 = vld [vmem:[#allocation7 + $0x7c] sm:$0xf]
    %v293 = vld [vmem:[#allocation7 + $0x80] sm:$0xf]
    %v294 = vld [vmem:[#allocation7 + $0x84] sm:$0xf]
    %v295 = vld [vmem:[#allocation7 + $0x88] sm:$0xf]
    %v296 = vld [vmem:[#allocation7 + $0x8c] sm:$0xf]
    %v297 = vld [vmem:[#allocation7 + $0x90] sm:$0xf]
    %v298 = vld [vmem:[#allocation7 + $0x94] sm:$0xf]
    %v299 = vld [vmem:[#allocation7 + $0x98] sm:$0xf]
    %v300 = vld [vmem:[#allocation7 + $0x9c] sm:$0xf]
    %v301 = vld [vmem:[#allocation7 + $0xa0] sm:$0xf]
    %v302 = vld [vmem:[#allocation7 + $0xa4] sm:$0xf]
    %v303 = vld [vmem:[#allocation7 + $0xa8] sm:$0xf]
    %v304 = vld [vmem:[#allocation7 + $0xac] sm:$0xf]
    %v305 = vld [vmem:[#allocation7 + $0xb0] sm:$0xf]
    %v306 = vld [vmem:[#allocation7 + $0xb4] sm:$0xf]
    %v307 = vld [vmem:[#allocation7 + $0xb8] sm:$0xf]
    %v308 = vld [vmem:[#allocation7 + $0xbc] sm:$0xf]
    %v309 = vld [vmem:[%s4] sm:$0x1]
    %v311 = vlaneseq
    %v312 = vshrl.u32 %v311, 7
    %v313 = vsub.s32 0, %v312
    %v314 = vrot.slane %v309, %v313
    %v364 = vunpack.c.l.b16 %v261
    %v365 = vunpack.c.l.b16 %v262
    %v366 = vunpack.c.l.b16 %v263
    %v367 = vunpack.c.l.b16 %v264
    %v368 = vunpack.c.l.b16 %v265
    %v369 = vunpack.c.l.b16 %v266
    %v370 = vunpack.c.l.b16 %v267
    %v371 = vunpack.c.l.b16 %v268
    %v372 = vunpack.c.l.b16 %v269
    %v373 = vunpack.c.l.b16 %v270
    %v374 = vunpack.c.l.b16 %v271
    %v375 = vunpack.c.l.b16 %v272
    %v376 = vunpack.c.l.b16 %v273
    %v377 = vunpack.c.l.b16 %v274
    %v378 = vunpack.c.l.b16 %v275
    %v379 = vunpack.c.l.b16 %v276
    %v380 = vunpack.c.l.b16 %v277
    %v381 = vunpack.c.l.b16 %v278
    %v382 = vunpack.c.l.b16 %v279
    %v383 = vunpack.c.l.b16 %v280
    %v384 = vunpack.c.l.b16 %v281
    %v385 = vunpack.c.l.b16 %v282
    %v386 = vunpack.c.l.b16 %v283
    %v387 = vunpack.c.l.b16 %v284
    %v388 = vunpack.c.l.b16 %v285
    %v389 = vunpack.c.l.b16 %v286
    %v390 = vunpack.c.l.b16 %v287
    %v391 = vunpack.c.l.b16 %v288
    %v392 = vunpack.c.l.b16 %v289
    %v393 = vunpack.c.l.b16 %v290
    %v394 = vunpack.c.l.b16 %v291
    %v395 = vunpack.c.l.b16 %v292
    %v396 = vunpack.c.l.b16 %v293
    %v397 = vunpack.c.l.b16 %v294
    %v398 = vunpack.c.l.b16 %v295
    %v399 = vunpack.c.l.b16 %v296
    %v400 = vunpack.c.l.b16 %v297
    %v401 = vunpack.c.l.b16 %v298
    %v402 = vunpack.c.l.b16 %v299
    %v403 = vunpack.c.l.b16 %v300
    %v404 = vunpack.c.l.b16 %v301
    %v405 = vunpack.c.l.b16 %v302
    %v406 = vunpack.c.l.b16 %v303
    %v407 = vunpack.c.l.b16 %v304
    %v408 = vunpack.c.l.b16 %v305
    %v409 = vunpack.c.l.b16 %v306
    %v410 = vunpack.c.l.b16 %v307
    %v411 = vunpack.c.l.b16 %v308
    %v412 = vpack.c.b16 %v365, %v364
    %v413 = vpack.c.b16 %v367, %v366
    %v414 = vpack.c.b16 %v369, %v368
    %v415 = vpack.c.b16 %v371, %v370
    %v416 = vpack.c.b16 %v373, %v372
    %v417 = vpack.c.b16 %v375, %v374
    %v418 = vpack.c.b16 %v377, %v376
    %v419 = vpack.c.b16 %v379, %v378
    %v420 = vpack.c.b16 %v381, %v380
    %v421 = vpack.c.b16 %v383, %v382
    %v422 = vpack.c.b16 %v385, %v384
    %v423 = vpack.c.b16 %v387, %v386
    %v424 = vpack.c.b16 %v389, %v388
    %v425 = vpack.c.b16 %v391, %v390
    %v426 = vpack.c.b16 %v393, %v392
    %v427 = vpack.c.b16 %v395, %v394
    %v428 = vpack.c.b16 %v397, %v396
    %v429 = vpack.c.b16 %v399, %v398
    %v430 = vpack.c.b16 %v401, %v400
    %v431 = vpack.c.b16 %v403, %v402
    %v432 = vpack.c.b16 %v405, %v404
    %v433 = vpack.c.b16 %v407, %v406
    %v434 = vpack.c.b16 %v409, %v408
    %v435 = vpack.c.b16 %v411, %v410
    %460 = vmatprep.subr.bf16.mxu0 0
    %461 = vmatpush1.bf16.msra.mxu0 %v412
    %462 = vmatprep.subr.bf16.mxu0 0
    %463 = vmatpush1.bf16.msra.mxu0 %v413
    %464 = vmatprep.subr.bf16.mxu0 0
    %465 = vmatpush1.bf16.msra.mxu0 %v414
    %466 = vmatprep.subr.bf16.mxu0 0
    %467 = vmatpush1.bf16.msra.mxu0 %v415
    %468 = vmatprep.subr.bf16.mxu0 0
    %469 = vmatpush1.bf16.msra.mxu0 %v416
    %470 = vmatprep.subr.bf16.mxu0 0
    %471 = vmatpush1.bf16.msra.mxu0 %v417
    %472 = vmatprep.subr.bf16.mxu0 0
    %473 = vmatpush1.bf16.msra.mxu0 %v418
    %474 = vmatprep.subr.bf16.mxu0 0
    %475 = vmatpush1.bf16.msra.mxu0 %v419
    %476 = vmatprep.subr.bf16.mxu0 0
    %477 = vmatpush1.bf16.msra.mxu0 %v420
    %478 = vmatprep.subr.bf16.mxu0 0
    %479 = vmatpush1.bf16.msra.mxu0 %v421
    %480 = vmatprep.subr.bf16.mxu0 0
    %481 = vmatpush1.bf16.msra.mxu0 %v422
    %482 = vmatprep.subr.bf16.mxu0 0
    %483 = vmatpush1.bf16.msra.mxu0 %v423
    %484 = vmatprep.subr.bf16.mxu0 0
    %485 = vmatpush1.bf16.msra.mxu0 %v424
    %486 = vmatprep.subr.bf16.mxu0 0
    %487 = vmatpush1.bf16.msra.mxu0 %v425
    %488 = vmatprep.subr.bf16.mxu0 0
    %489 = vmatpush1.bf16.msra.mxu0 %v426
    %490 = vmatprep.subr.bf16.mxu0 0
    %491 = vmatpush1.bf16.msra.mxu0 %v427
    %492 = vmatprep.mubr.bf16.mxu0 %v259
    %493 = vmatmul.mubr.bf16.gmra.mrb[0].mxu0 %v258
    %v494 = vpop.f32.mrb[0].mxu0
    %v495 = vadd.f32 %v314, %v494
    %v496 = vpop.f32.mrb[0].mxu0
    %v497 = vpop.f32.mrb[0].mxu0
    %v498 = vpop.f32.mrb[0].mxu0
    %499 = vdwg.mxu0
    %500 = vmatprep.subr.bf16.mxu0 0
    %501 = vmatpush1.bf16.msra.mxu0 %v428
    %502 = vmatprep.subr.bf16.mxu0 0
    %503 = vmatpush1.bf16.msra.mxu0 %v429
    %504 = vmatprep.subr.bf16.mxu0 0
    %505 = vmatpush1.bf16.msra.mxu0 %v430
    %506 = vmatprep.subr.bf16.mxu0 0
    %507 = vmatpush1.bf16.msra.mxu0 %v431
    %508 = vmatprep.subr.bf16.mxu0 0
    %509 = vmatpush1.bf16.msra.mxu0 %v432
    %510 = vmatprep.subr.bf16.mxu0 0
    %511 = vmatpush1.bf16.msra.mxu0 %v433
    %512 = vmatprep.subr.bf16.mxu0 0
    %513 = vmatpush1.bf16.msra.mxu0 %v434
    %514 = vmatprep.subr.bf16.mxu0 0
    %515 = vmatpush1.bf16.msra.mxu0 %v435
    %516 = vmatprep.subr.bf16.mxu0 0
    %517 = vmatpush1.bf16.msra.mxu0 0
    %518 = vmatprep.subr.bf16.mxu0 0
    %519 = vmatpush1.bf16.msra.mxu0 0
    %520 = vmatprep.subr.bf16.mxu0 0
    %521 = vmatpush1.bf16.msra.mxu0 0
    %522 = vmatprep.subr.bf16.mxu0 0
    %523 = vmatpush1.bf16.msra.mxu0 0
    %524 = vmatprep.subr.bf16.mxu0 0
    %525 = vmatpush1.bf16.msra.mxu0 0
    %526 = vmatprep.subr.bf16.mxu0 0
    %527 = vmatpush1.bf16.msra.mxu0 0
    %528 = vmatprep.subr.bf16.mxu0 0
    %529 = vmatpush1.bf16.msra.mxu0 0
    %530 = vmatprep.subr.bf16.mxu0 0
    %531 = vmatpush1.bf16.msra.mxu0 0
    %532 = vmatprep.mubr.bf16.mxu0 0
    %533 = vmatmul.mubr.bf16.gmra.mrb[0].mxu0 %v260
    %v534 = vpop.f32.mrb[0].mxu0
    %v535 = vadd.f32 %v495, %v534
    %v536 = vpop.f32.mrb[0].mxu0
    %v537 = vpop.f32.mrb[0].mxu0
    %v538 = vpop.f32.mrb[0].mxu0
    %539 = vdwg.mxu0
    %v540 = vmax.f32 %v535, 0.0
    %v541 = vld [vmem:[%s5] sm:$0x1]
    %v543 = vlaneseq
    %v544 = vshrl.u32 %v543, 7
    %v545 = vsub.s32 0, %v544
    %v546 = vrot.slane %v541, %v545
    %v548 = vmul.f32 %v540, %v546
    %549 = vadd.xlane.f32.xlu0 %v548
    %v550 = vpop.xlane.xlu0 %549
    %v551 = vld [vmem:[#allocation2] sm:$0x1]
    %v553 = vlaneseq
    %v554 = vshrl.u32 %v553, 7
    %v555 = vsub.s32 0, %v554
    %v556 = vrot.slane %v551, %v555
    %v558 = vadd.f32 %v550, %v556
    %v559 = vmul.f32 %v558, 0.5
    %v560 = vtanh.pop %v559
    %v561 = vmul.f32 %v560, 0.5
    %v562 = vadd.f32 %v561, 0.5
    %vm563 = vcmask 7168
    %564 = vst.msk [vmem:[%s7] sm:$0xff] %vm563, %v562
    // Predicated region
    $region42: #{mlp_forward.1} parent=1 // pred_check
      _
    $region43: #{mlp_forward.1} parent=1 // pred_check_branch
      %566 = sbr.rel (0) target = $region45
    $region44: #{mlp_forward.1} parent=1 // pred_region
      _
    $region45: #{mlp_forward.1} parent=1 // pred_fallthru
      _
    // Predicated region
    $region46: #{mlp_forward.1} parent=1 // pred_check
      _
    $region47: #{mlp_forward.1} parent=1 // pred_check_branch
      %568 = sbr.rel (0) target = $region49
    $region48: #{mlp_forward.1} parent=1 // pred_region
      _
    $region49: #{mlp_forward.1} parent=1 // pred_fallthru
      _
    %569 = vsyncpa [#allocation4], 1
    %570 = vsyncpa [#allocation6], 1

</llo_original>
